<compile_context>
chip_gen: v5e
topology: v5e:2x2
jax: 0.10.0
libtpu: 0.0.40
codegen_flags: <defaults>
</compile_context>

<pallas_src>
import functools

import jax
import jax.numpy as jnp
from jax.experimental import pallas as pl
from jax.experimental.pallas import tpu as pltpu


def _round_up(x, m):
    return ((x + m - 1) // m) * m


def _vq_kernel(x_ref, emm_ref, emb_ref, e2h_ref, q_ref, idx_ref, counts_ref,
               sse_ref, *, n_valid, tile_rows):
    """One (TN, Dp) row tile against the resident (Mp, Dp) codebook.

    x_ref:      (TN, Dp) f32        padded input rows for this tile
    emm_ref:    (Mp, Dp) bf16|f32   codebook copy used for the distance matmul
    emb_ref:    (Mp, Dp) f32        exact codebook (one-hot gather)
    e2h_ref:    (1,  Mp) f32        0.5*||e||^2 (padded codes = 1e30)
    q_ref:      (TN, Dp) f32        quantized rows (embedding[idx]; 0 for pads)
    idx_ref:    (1,1,TN) i32        nearest-code indices (lane-dense)
    counts_ref: (1,1,Mp) f32        per-tile one-hot counts (pad rows masked)
    sse_ref:    (1,1,Dp) f32        per-tile per-column sum of squared error
    """
    x = x_ref[...]                                   # (TN, Dp) f32
    TN, Dp = x_ref.shape
    Mp = emb_ref.shape[0]

    # argmin ||x - e||^2  ==  argmax( x.e^T - 0.5*||e||^2 ).
    # Dominant matmul in the matmul dtype (bf16 by default), f32 accumulation.
    xm = x.astype(emm_ref.dtype)
    score = jax.lax.dot_general(xm, emm_ref[...], (((1,), (1,)), ((), ())),
                                preferred_element_type=jnp.float32)  # (TN, Mp)
    score = score - e2h_ref[...]                      # broadcast (1, Mp)

    # argmax with first-index tie-break (matches torch/jnp argmin).
    smax = jnp.max(score, axis=-1, keepdims=True)                    # (TN, 1)
    code_iota = jax.lax.broadcasted_iota(jnp.int32, (1, Mp), 1)      # lane iota
    idx = jnp.min(jnp.where(score == smax, code_iota, Mp), axis=-1)  # (TN,)
    idx_ref[...] = idx.reshape(1, 1, TN).astype(jnp.int32)

    # Mask rows beyond the true N (tile padding) out of all reductions.
    row_ids = (pl.program_id(0) * tile_rows
               + jax.lax.broadcasted_iota(jnp.int32, (TN, 1), 0))
    valid = (row_ids < n_valid).astype(jnp.float32)                  # (TN, 1)

    onehot = (code_iota == idx[:, None]).astype(jnp.float32) * valid  # (TN, Mp)

    # Exact f32 row gather: quantized = onehot @ embedding (MXU).
    q = jnp.dot(onehot, emb_ref[...], preferred_element_type=jnp.float32)
    q_ref[...] = q

    # Column reductions pushed onto the MXU (ones-row dots) instead of XLU.
    ones_row = jnp.ones((1, TN), jnp.float32)
    counts_ref[...] = jnp.dot(
        ones_row, onehot, preferred_element_type=jnp.float32).reshape(1, 1, Mp)

    # Padded rows/cols of x and q are exactly zero, so diff needs no masking.
    diff = x - q
    sse_ref[...] = jnp.dot(
        ones_row, diff * diff,
        preferred_element_type=jnp.float32).reshape(1, 1, Dp)


def _choose_block_rows(n_rows, d_pad, m_pad, mm_itemsize, requested):
    """Pick the row-tile size TN from the per-core VMEM capacity."""
    try:
        vmem_cap = int(pltpu.get_tpu_info().vmem_capacity_bytes)
    except Exception:                       # pragma: no cover - conservative
        vmem_cap = 64 * 1024 * 1024         # v7x per-TC VMEM (smallest gen)
    vmem_cap = min(vmem_cap, 128 * 1024 * 1024)
    budget = (7 * vmem_cap) // 10           # ~90 MiB on v5e/v6e, ~45 MiB on v7x

    # Resident blocks: f32 codebook (gather) + matmul-dtype codebook + e2h.
    # Conservatively count the default double buffer (x2) for each.
    resident = 2 * (m_pad * d_pad * (4 + mm_itemsize) + 4 * m_pad)

    # Per-row bytes while a tile is in flight:
    #   x & q HBM blocks double-buffered (f32), the bf16 cast of x,
    #   the (row, Mp) score/where/onehot intermediates, and f32 q/diff temps.
    bytes_per_row = (4 * 4 * d_pad          # x + q blocks, double-buffered
                     + mm_itemsize * d_pad  # matmul-dtype copy of x tile
                     + 4 * 3 * m_pad        # score / tie-break where / onehot
                     + 4 * 2 * d_pad        # q / diff temporaries
                     + 32)                  # idx / counts / sse slivers
    avail = budget - resident
    tn_budget = max(avail // bytes_per_row, 8) if avail > 0 else 8
    tn = min(max(requested, 8), tn_budget)

    n8 = _round_up(n_rows, 8)
    if n8 < 128 or requested < 128:
        # Tiny inputs (or explicit small tiles): multiples of 8.
        tn = max(8, min(tn, n8))
        tn = (tn // 8) * 8
    else:
        # MXU-friendly, lane-dense idx output: multiples of 128.
        tn = max(128, (tn // 128) * 128)
        tn = min(tn, _round_up(n_rows, 128))
    return tn, vmem_cap


@functools.partial(
    jax.jit,
    static_argnames=("commitment_cost", "block_rows", "precise_distances"))
def vq_embedding_forward(x, embedding, commitment_cost=0.25, block_rows=2048,
                         precise_distances=False):
    """Eval-mode VQEmbeddingEMA.forward.

    x:         (..., D) float32
    embedding: (M, D)   float32
    precise_distances: run the distance matmul in f32 (exact torch argmin
        parity) instead of the default bf16 fast path.
    Returns dict with 'x', 'vq_loss', 'perplexity', 'encoding_indices'.
    """
    orig_shape = x.shape
    D = orig_shape[-1]
    M = embedding.shape[0]
    x_flat = x.reshape(-1, D).astype(jnp.float32)
    N = x_flat.shape[0]

    D_pad = _round_up(D, 128)
    M_pad = _round_up(M, 128)
    mm_dtype = jnp.float32 if precise_distances else jnp.bfloat16
    TN, vmem_cap = _choose_block_rows(
        N, D_pad, M_pad, jnp.dtype(mm_dtype).itemsize, block_rows)
    N_pad = _round_up(N, TN)
    num_tiles = N_pad // TN

    x_p = jnp.pad(x_flat, ((0, N_pad - N), (0, D_pad - D)))
    emb_p = jnp.pad(embedding.astype(jnp.float32),
                    ((0, M_pad - M), (0, D_pad - D)))
    emb_mm = emb_p.astype(mm_dtype)

    # Hoisted half squared norms; padded codes get a huge norm so their score
    # (xe - e2h) can never be the argmax.
    e2h = 0.5 * jnp.sum(emb_p * emb_p, axis=1)
    e2h = jnp.where(jnp.arange(M_pad) < M, e2h, jnp.float32(1e30))[None, :]

    kernel = functools.partial(_vq_kernel, n_valid=N, tile_rows=TN)

    q_p, idx_p, counts_p, sse_p = pl.pallas_call(
        kernel,
        out_shape=(
            jax.ShapeDtypeStruct((N_pad, D_pad), jnp.float32),
            jax.ShapeDtypeStruct((num_tiles, 1, TN), jnp.int32),
            jax.ShapeDtypeStruct((num_tiles, 1, M_pad), jnp.float32),
            jax.ShapeDtypeStruct((num_tiles, 1, D_pad), jnp.float32),
        ),
        grid=(num_tiles,),
        in_specs=[
            pl.BlockSpec((TN, D_pad), lambda i: (i, 0)),
            pl.BlockSpec((M_pad, D_pad), lambda i: (0, 0)),  # matmul codebook
            pl.BlockSpec((M_pad, D_pad), lambda i: (0, 0)),  # f32 codebook
            pl.BlockSpec((1, M_pad), lambda i: (0, 0)),      # 0.5*||e||^2
        ],
        out_specs=(
            pl.BlockSpec((TN, D_pad), lambda i: (i, 0)),
            pl.BlockSpec((1, 1, TN), lambda i: (i, 0, 0)),
            pl.BlockSpec((1, 1, M_pad), lambda i: (i, 0, 0)),
            pl.BlockSpec((1, 1, D_pad), lambda i: (i, 0, 0)),
        ),
        compiler_params=pltpu.CompilerParams(
            dimension_semantics=("parallel",),
            vmem_limit_bytes=(vmem_cap * 27) // 32,
        ),
    )(x_p, emb_mm, emb_p, e2h)

    quantized = q_p[:N, :D].reshape(orig_shape)
    indices = idx_p.reshape(-1)[:N]
    counts = jnp.sum(counts_p, axis=(0, 1))[:M]        # (M,)
    sse = jnp.sum(sse_p)

    # q_latent_loss = mse(x.detach(), q); e_latent_loss = mse(x, q.detach()).
    # Forward values are identical; gradient structure is not reproduced here.
    mse = sse / jnp.float32(N * D)
    loss = mse + commitment_cost * mse

    # Straight-through estimator (same forward value as quantized).
    quantized_st = x + jax.lax.stop_gradient(quantized - x)

    avg_probs = counts / jnp.float32(N)
    perplexity = jnp.exp(-jnp.sum(avg_probs * jnp.log(avg_probs + 1e-10)))

    return {
        "x": quantized_st,
        "vq_loss": loss,
        "perplexity": perplexity,
        "encoding_indices": indices,
    }


def _f32_reference(x, embedding, commitment_cost):
    """Pure-JAX torch-equivalent forward (f32 distances)."""
    D = x.shape[-1]
    M = embedding.shape[0]
    x_flat = x.reshape(-1, D)
    dist = (jnp.sum(embedding ** 2, axis=1)[None, :]
            + jnp.sum(x_flat ** 2, axis=1, keepdims=True)
            - 2.0 * x_flat @ embedding.T)
    idx = jnp.argmin(dist, axis=-1)
    q = embedding[idx].reshape(x.shape)
    mse = jnp.mean((x - q) ** 2)
    loss = mse + commitment_cost * mse
    onehot = jax.nn.one_hot(idx, M, dtype=jnp.float32)
    avg_probs = jnp.mean(onehot, axis=0)
    ppl = jnp.exp(-jnp.sum(avg_probs * jnp.log(avg_probs + 1e-10)))
    return dist, idx, q, loss, ppl


def _from_indices(x, embedding, idx, commitment_cost):
    """Expected outputs given a particular code assignment."""
    D = x.shape[-1]
    M = embedding.shape[0]
    x_flat = x.reshape(-1, D)
    q = embedding[idx]
    mse = jnp.mean((x_flat - q) ** 2)
    loss = mse + commitment_cost * mse
    counts = jnp.sum(jax.nn.one_hot(idx, M, dtype=jnp.float32), axis=0)
    avg_probs = counts / jnp.float32(x_flat.shape[0])
    ppl = jnp.exp(-jnp.sum(avg_probs * jnp.log(avg_probs + 1e-10)))
    return q.reshape(x.shape), loss, ppl


if __name__ == "__main__":
    # Module config (n_embeddings=M, embedding_dim=D) and small input shapes.
    M, D = 64, 32
    B, T = 2, 8

    key = jax.random.PRNGKey(0)
    kx, ke, kx2 = jax.random.split(key, 3)

    # embedding ~ Uniform(-1/M, 1/M), deterministic
    init_bound = 1.0 / M
    embedding = jax.random.uniform(
        ke, (M, D), dtype=jnp.float32, minval=-init_bound, maxval=init_bound)

    x = jax.random.normal(kx, (B, T, D), dtype=jnp.float32)
    x_flat = x.reshape(-1, D)

    # --- exact path (f32 distance matmul): bit-parity with the reference.
    res_exact = vq_embedding_forward(x, embedding, precise_distances=True)
    jax.block_until_ready(res_exact)
    dist, ridx, rq, rloss, rppl = _f32_reference(x, embedding, 0.25)
    assert jnp.array_equal(res_exact["encoding_indices"],
                           ridx.astype(jnp.int32))
    assert jnp.allclose(res_exact["x"], rq, atol=1e-5)
    assert jnp.allclose(res_exact["vq_loss"], rloss, atol=1e-5)
    assert jnp.allclose(res_exact["perplexity"], rppl, atol=1e-4)

    # --- default fast path (bf16 distance matmul, f32 gather / reductions).
    res = vq_embedding_forward(x, embedding)
    jax.block_until_ready(res)
    idx_k = res["encoding_indices"].astype(jnp.int32)
    chosen_d = jnp.take_along_axis(dist, idx_k[:, None], axis=1)[:, 0]
    best_d = jnp.min(dist, axis=1)
    # Chosen codes are (near-)optimal under exact f32 distances (bf16 may only
    # flip essentially-equidistant ties).
    assert float(jnp.max(chosen_d - best_d)) <= 5e-2
    exp_q, exp_loss, exp_ppl = _from_indices(x, embedding, idx_k, 0.25)
    assert jnp.allclose(res["x"], exp_q, atol=1e-5)
    assert jnp.allclose(res["vq_loss"], exp_loss, atol=1e-5)
    assert jnp.allclose(res["perplexity"], exp_ppl, atol=1e-4)

    # --- multi-tile + row-masking path (N=15 not a multiple of the 8-row tile).
    x2 = jax.random.normal(kx2, (3, 5, D), dtype=jnp.float32)
    res2 = vq_embedding_forward(x2, embedding, block_rows=8,
                                precise_distances=True)
    jax.block_until_ready(res2)
    d2, ridx2, rq2, rloss2, rppl2 = _f32_reference(x2, embedding, 0.25)
    assert jnp.array_equal(res2["encoding_indices"], ridx2.astype(jnp.int32))
    assert jnp.allclose(res2["x"], rq2, atol=1e-5)
    assert jnp.allclose(res2["vq_loss"], rloss2, atol=1e-5)
    assert jnp.allclose(res2["perplexity"], rppl2, atol=1e-4)

    # bf16 path on the masked multi-tile case (consistency checks).
    res2f = vq_embedding_forward(x2, embedding, block_rows=8)
    jax.block_until_ready(res2f)
    idx2f = res2f["encoding_indices"].astype(jnp.int32)
    chosen2 = jnp.take_along_axis(d2, idx2f[:, None], axis=1)[:, 0]
    assert float(jnp.max(chosen2 - jnp.min(d2, axis=1))) <= 5e-2
    q2e, loss2e, ppl2e = _from_indices(x2, embedding, idx2f, 0.25)
    assert jnp.allclose(res2f["x"], q2e, atol=1e-5)
    assert jnp.allclose(res2f["vq_loss"], loss2e, atol=1e-5)
    assert jnp.allclose(res2f["perplexity"], ppl2e, atol=1e-4)

    print("KERNEL_OK")
</pallas_src>

<mosaic_0001>
module attributes {stable_mosaic.version = 11 : i64} {
  func.func @_vq_kernel(%arg0: i32, %arg1: memref<16x128xf32, #tpu.memory_space<vmem>>, %arg2: memref<128x128xf32, #tpu.memory_space<vmem>>, %arg3: memref<128x128xf32, #tpu.memory_space<vmem>>, %arg4: memref<1x128xf32, #tpu.memory_space<vmem>>, %arg5: memref<16x128xf32, #tpu.memory_space<vmem>>, %arg6: memref<1x1x16xi32, #tpu.memory_space<vmem>>, %arg7: memref<1x1x128xf32, #tpu.memory_space<vmem>>, %arg8: memref<1x1x128xf32, #tpu.memory_space<vmem>>) attributes {dimension_semantics = [#tpu.dimension_semantics<parallel>], iteration_bounds = array<i64: 1>, scalar_prefetch = 0 : i64, scratch_operands = 0 : i64, tpu.core_type = #tpu.core_type<tc>, window_params = [{transform_indices = @transform_0, window_bounds = array<i64: 16, 128>}, {pipeline_mode = #tpu.pipeline_mode<synchronous>, transform_indices = @transform_1, window_bounds = array<i64: 128, 128>}, {pipeline_mode = #tpu.pipeline_mode<synchronous>, transform_indices = @transform_2, window_bounds = array<i64: 128, 128>}, {pipeline_mode = #tpu.pipeline_mode<synchronous>, transform_indices = @transform_3, window_bounds = array<i64: 1, 128>}, {transform_indices = @transform_4, window_bounds = array<i64: 16, 128>}, {transform_indices = @transform_5, window_bounds = array<i64: 1, 1, 16>}, {transform_indices = @transform_6, window_bounds = array<i64: 1, 1, 128>}, {transform_indices = @transform_7, window_bounds = array<i64: 1, 1, 128>}]} {
    %c0 = arith.constant 0 : index
    %c0_0 = arith.constant 0 : index
    %0 = vector.load %arg1[%c0, %c0_0] : memref<16x128xf32, #tpu.memory_space<vmem>>, vector<16x128xf32>
    %c0_1 = arith.constant 0 : index
    %c0_2 = arith.constant 0 : index
    %1 = vector.load %arg2[%c0_1, %c0_2] : memref<128x128xf32, #tpu.memory_space<vmem>>, vector<128x128xf32>
    %cst = arith.constant dense<0.000000e+00> : vector<16x128xf32>
    %2 = tpu.matmul %0, %1, %cst {dimension_numbers = #tpu.dot_dimension_numbers<[1], [1], [0], [0], [0, 0, 1, 0], [], []>} : vector<16x128xf32>, vector<128x128xf32>, vector<16x128xf32> -> vector<16x128xf32>
    %c0_3 = arith.constant 0 : index
    %c0_4 = arith.constant 0 : index
    %3 = vector.load %arg4[%c0_3, %c0_4] : memref<1x128xf32, #tpu.memory_space<vmem>>, vector<1x128xf32>
    %4 = vector.broadcast %3 : vector<1x128xf32> to vector<16x128xf32>
    %5 = arith.subf %2, %4 : vector<16x128xf32>
    %cst_5 = arith.constant dense<0xFF800000> : vector<16xf32>
    %6 = vector.multi_reduction <maximumf>, %5, %cst_5 [1] : vector<16x128xf32> to vector<16xf32>
    %7 = vector.shape_cast %6 : vector<16xf32> to vector<16x1xf32>
    %8 = tpu.iota {dimensions = array<i32: 1>} : vector<1x128xi32>
    %9 = vector.broadcast %7 : vector<16x1xf32> to vector<16x128xf32>
    %10 = arith.cmpf oeq, %5, %9 : vector<16x128xf32>
    %c128_i32 = arith.constant 128 : i32
    %11 = vector.shape_cast %8 : vector<1x128xi32> to vector<1x128xi32>
    %12 = vector.broadcast %11 : vector<1x128xi32> to vector<16x128xi32>
    %13 = vector.broadcast %c128_i32 : i32 to vector<16x128xi32>
    %14 = arith.select %10, %12, %13 : vector<16x128xi1>, vector<16x128xi32>
    %cst_6 = arith.constant dense<2147483647> : vector<16xi32>
    %15 = vector.multi_reduction <minsi>, %14, %cst_6 [1] : vector<16x128xi32> to vector<16xi32>
    %16 = vector.shape_cast %15 : vector<16xi32> to vector<1x1x16xi32>
    %c0_7 = arith.constant 0 : index
    %c0_8 = arith.constant 0 : index
    %c0_9 = arith.constant 0 : index
    %17 = vector.load %arg6[%c0_7, %c0_8, %c0_9] : memref<1x1x16xi32, #tpu.memory_space<vmem>>, vector<1x1x16xi32>
    tpu.vector_store %arg6[%c0_7, %c0_8, %c0_9], %16 {strides = array<i32>} : memref<1x1x16xi32, #tpu.memory_space<vmem>>, vector<1x1x16xi32>,
    %c16_i32 = arith.constant 16 : i32
    %18 = arith.muli %arg0, %c16_i32 : i32
    %19 = tpu.iota {dimensions = array<i32: 0>} : vector<16x1xi32>
    %20 = vector.broadcast %18 : i32 to vector<16x1xi32>
    %21 = arith.addi %20, %19 : vector<16x1xi32>
    %c16_i32_10 = arith.constant 16 : i32
    %22 = vector.broadcast %c16_i32_10 : i32 to vector<16x1xi32>
    %23 = arith.cmpi slt, %21, %22 : vector<16x1xi32>
    %24 = arith.extui %23 : vector<16x1xi1> to vector<16x1xi32>
    %25 = arith.sitofp %24 : vector<16x1xi32> to vector<16x1xf32>
    %26 = vector.shape_cast %15 : vector<16xi32> to vector<16x1xi32>
    %27 = vector.broadcast %8 : vector<1x128xi32> to vector<16x128xi32>
    %28 = vector.broadcast %26 : vector<16x1xi32> to vector<16x128xi32>
    %29 = arith.cmpi eq, %27, %28 : vector<16x128xi32>
    %30 = arith.extui %29 : vector<16x128xi1> to vector<16x128xi32>
    %31 = arith.sitofp %30 : vector<16x128xi32> to vector<16x128xf32>
    %32 = vector.broadcast %25 : vector<16x1xf32> to vector<16x128xf32>
    %33 = arith.mulf %31, %32 : vector<16x128xf32>
    %c0_11 = arith.constant 0 : index
    %c0_12 = arith.constant 0 : index
    %34 = vector.load %arg3[%c0_11, %c0_12] : memref<128x128xf32, #tpu.memory_space<vmem>>, vector<128x128xf32>
    %cst_13 = arith.constant dense<0.000000e+00> : vector<16x128xf32>
    %35 = tpu.matmul %33, %34, %cst_13 {dimension_numbers = #tpu.dot_dimension_numbers<[1], [0], [0], [1], [0, 0, 1, 1], [], []>} : vector<16x128xf32>, vector<128x128xf32>, vector<16x128xf32> -> vector<16x128xf32>
    %c0_14 = arith.constant 0 : index
    %c0_15 = arith.constant 0 : index
    %36 = vector.load %arg5[%c0_14, %c0_15] : memref<16x128xf32, #tpu.memory_space<vmem>>, vector<16x128xf32>
    tpu.vector_store %arg5[%c0_14, %c0_15], %35 {strides = array<i32>} : memref<16x128xf32, #tpu.memory_space<vmem>>, vector<16x128xf32>,
    %cst_16 = arith.constant 1.000000e+00 : f32
    %37 = vector.broadcast %cst_16 : f32 to vector<1x16xf32>
    %cst_17 = arith.constant dense<0.000000e+00> : vector<1x128xf32>
    %38 = tpu.matmul %37, %33, %cst_17 {dimension_numbers = #tpu.dot_dimension_numbers<[1], [0], [0], [1], [0, 0, 1, 1], [], []>} : vector<1x16xf32>, vector<16x128xf32>, vector<1x128xf32> -> vector<1x128xf32>
    %39 = vector.shape_cast %38 : vector<1x128xf32> to vector<1x1x128xf32>
    %c0_18 = arith.constant 0 : index
    %c0_19 = arith.constant 0 : index
    %c0_20 = arith.constant 0 : index
    %40 = vector.load %arg7[%c0_18, %c0_19, %c0_20] : memref<1x1x128xf32, #tpu.memory_space<vmem>>, vector<1x1x128xf32>
    tpu.vector_store %arg7[%c0_18, %c0_19, %c0_20], %39 {strides = array<i32>} : memref<1x1x128xf32, #tpu.memory_space<vmem>>, vector<1x1x128xf32>,
    %41 = arith.subf %0, %35 : vector<16x128xf32>
    %42 = arith.mulf %41, %41 : vector<16x128xf32>
    %cst_21 = arith.constant dense<0.000000e+00> : vector<1x128xf32>
    %43 = tpu.matmul %37, %42, %cst_21 {dimension_numbers = #tpu.dot_dimension_numbers<[1], [0], [0], [1], [0, 0, 1, 1], [], []>} : vector<1x16xf32>, vector<16x128xf32>, vector<1x128xf32> -> vector<1x128xf32>
    %44 = vector.shape_cast %43 : vector<1x128xf32> to vector<1x1x128xf32>
    %c0_22 = arith.constant 0 : index
    %c0_23 = arith.constant 0 : index
    %c0_24 = arith.constant 0 : index
    %45 = vector.load %arg8[%c0_22, %c0_23, %c0_24] : memref<1x1x128xf32, #tpu.memory_space<vmem>>, vector<1x1x128xf32>
    tpu.vector_store %arg8[%c0_22, %c0_23, %c0_24], %44 {strides = array<i32>} : memref<1x1x128xf32, #tpu.memory_space<vmem>>, vector<1x1x128xf32>,
    return
  }
  func.func @transform_0(%arg0: i32) -> (i32, i32) {
    %c0_i32 = arith.constant 0 : i32
    %c0_i32_0 = arith.constant 0 : i32
    return %arg0, %c0_i32 : i32, i32
  }
  func.func @transform_1(%arg0: i32) -> (i32, i32) {
    %c0_i32 = arith.constant 0 : i32
    %c0_i32_0 = arith.constant 0 : i32
    %c0_i32_1 = arith.constant 0 : i32
    return %c0_i32, %c0_i32_0 : i32, i32
  }
  func.func @transform_2(%arg0: i32) -> (i32, i32) {
    %c0_i32 = arith.constant 0 : i32
    %c0_i32_0 = arith.constant 0 : i32
    %c0_i32_1 = arith.constant 0 : i32
    return %c0_i32, %c0_i32_0 : i32, i32
  }
  func.func @transform_3(%arg0: i32) -> (i32, i32) {
    %c0_i32 = arith.constant 0 : i32
    %c0_i32_0 = arith.constant 0 : i32
    %c0_i32_1 = arith.constant 0 : i32
    return %c0_i32, %c0_i32_0 : i32, i32
  }
  func.func @transform_4(%arg0: i32) -> (i32, i32) {
    %c0_i32 = arith.constant 0 : i32
    %c0_i32_0 = arith.constant 0 : i32
    return %arg0, %c0_i32 : i32, i32
  }
  func.func @transform_5(%arg0: i32) -> (i32, i32, i32) {
    %c0_i32 = arith.constant 0 : i32
    %c0_i32_0 = arith.constant 0 : i32
    %c0_i32_1 = arith.constant 0 : i32
    return %arg0, %c0_i32, %c0_i32_0 : i32, i32, i32
  }
  func.func @transform_6(%arg0: i32) -> (i32, i32, i32) {
    %c0_i32 = arith.constant 0 : i32
    %c0_i32_0 = arith.constant 0 : i32
    %c0_i32_1 = arith.constant 0 : i32
    return %arg0, %c0_i32, %c0_i32_0 : i32, i32, i32
  }
  func.func @transform_7(%arg0: i32) -> (i32, i32, i32) {
    %c0_i32 = arith.constant 0 : i32
    %c0_i32_0 = arith.constant 0 : i32
    %c0_i32_1 = arith.constant 0 : i32
    return %arg0, %c0_i32, %c0_i32_0 : i32, i32, i32
  }
}

</mosaic_0001>

<llo_original>
// kernel: vq_embedding_forward.1
$region0: #{vq_embedding_forward.1}
  #allocation0 [shape = 'u32[]', space=smem, size = 0x4, offset = 0x4, fixed_abs, tag = 'smem constant byte address 0x4 - core index']
  #allocation1 [shape = 'u32[72,128]{1,0:T(1,128)}', space=vmem, size = 0x9000, scoped, tag = 'internal scratch']
  %s0 = inlined_call_operand.vmem [shape: f32[16,128], index: 0, kind: input, shape index: {}]
  %s1 = inlined_call_operand.vmem [shape: f32[128,128], index: 1, kind: input, shape index: {}, may-alias: {1,2}]
  %s2 = inlined_call_operand.vmem [shape: f32[128,128], index: 2, kind: input, shape index: {}, may-alias: {1,2}]
  %s3 = inlined_call_operand.vmem [shape: f32[1,128], index: 3, kind: input, shape index: {}]
  %s4 = inlined_call_operand.vmem [shape: f32[16,128], index: 4, kind: output, shape index: {0}]
  %s5 = inlined_call_operand.hbm [shape: s32[1,1,16], index: 5, kind: output, shape index: {1}]
  %s6 = inlined_call_operand.vmem [shape: f32[1,1,128], index: 6, kind: output, shape index: {2}]
  %s7 = inlined_call_operand.vmem [shape: f32[1,1,128], index: 7, kind: output, shape index: {3}]
  %8 = xla_tuple %s4, %s5, %s6, %s7
  %s9 = sld [smem:[#allocation0]]
  $region50: #{vq_embedding_forward.1} parent=0
    _
  %s11 = ssub.s32 1, %s9
  %s12 = scalar_select 0, %s11, %s9
  $region1: #{vq_embedding_forward.1} parent=0
    #allocation2 [shape = 'u8[512]{0}', space=vmem, size = 0x400, scoped, tag = 'output window, operand 1, single buffered']
    #allocation3 [shape = 's32[1]{0}', space=sflag, size = 0x4, scoped, tag = 'scoped memory for vq_embedding_forward.1']
    %13 = vsyncpa [#allocation3], 0
    // Predicated region
    $region2: #{vq_embedding_forward.1} parent=1 // pred_check
      _
    $region3: #{vq_embedding_forward.1} parent=1 // pred_check_branch
      %15 = sbr.rel (0) target = $region5
    $region4: #{vq_embedding_forward.1} parent=1 // pred_region
      _
    $region5: #{vq_embedding_forward.1} parent=1 // pred_fallthru
      _
    // Predicated region
    $region6: #{vq_embedding_forward.1} parent=1 // pred_check
      _
    $region7: #{vq_embedding_forward.1} parent=1 // pred_check_branch
      %17 = sbr.rel (0) target = $region9
    $region8: #{vq_embedding_forward.1} parent=1 // pred_region
      _
    $region9: #{vq_embedding_forward.1} parent=1 // pred_fallthru
      _
    // Predicated region
    $region10: #{vq_embedding_forward.1} parent=1 // pred_check
      _
    $region11: #{vq_embedding_forward.1} parent=1 // pred_check_branch
      %19 = sbr.rel (0) target = $region13
    $region12: #{vq_embedding_forward.1} parent=1 // pred_region
      _
    $region13: #{vq_embedding_forward.1} parent=1 // pred_fallthru
      _
    // Predicated region
    $region14: #{vq_embedding_forward.1} parent=1 // pred_check
      _
    $region15: #{vq_embedding_forward.1} parent=1 // pred_check_branch
      %21 = sbr.rel (0) target = $region17
    $region16: #{vq_embedding_forward.1} parent=1 // pred_region
      _
    $region17: #{vq_embedding_forward.1} parent=1 // pred_fallthru
      _
    %v22 = vld [vmem:[%s0] sm:$0xff]
    %v23 = vld [vmem:[%s0 + $0x8] sm:$0xff]
    %v24 = vld [vmem:[%s1] sm:$0xff]
    %v25 = vld [vmem:[%s1 + $0x8] sm:$0xff]
    %v26 = vld [vmem:[%s1 + $0x10] sm:$0xff]
    %v27 = vld [vmem:[%s1 + $0x18] sm:$0xff]
    %v28 = vld [vmem:[%s1 + $0x20] sm:$0xff]
    %v29 = vld [vmem:[%s1 + $0x28] sm:$0xff]
    %v30 = vld [vmem:[%s1 + $0x30] sm:$0xff]
    %v31 = vld [vmem:[%s1 + $0x38] sm:$0xff]
    %v32 = vld [vmem:[%s1 + $0x40] sm:$0xff]
    %v33 = vld [vmem:[%s1 + $0x48] sm:$0xff]
    %v34 = vld [vmem:[%s1 + $0x50] sm:$0xff]
    %v35 = vld [vmem:[%s1 + $0x58] sm:$0xff]
    %v36 = vld [vmem:[%s1 + $0x60] sm:$0xff]
    %v37 = vld [vmem:[%s1 + $0x68] sm:$0xff]
    %v38 = vld [vmem:[%s1 + $0x70] sm:$0xff]
    %v39 = vld [vmem:[%s1 + $0x78] sm:$0xff]
    %40 = vmatpush.xpose.msra.mxu0 %v39
    %41 = vmatpush.xpose.msra.mxu0 %v38
    %42 = vmatpush.xpose.msra.mxu0 %v37
    %43 = vmatpush.xpose.msra.mxu0 %v36
    %44 = vmatpush.xpose.msra.mxu0 %v35
    %45 = vmatpush.xpose.msra.mxu0 %v34
    %46 = vmatpush.xpose.msra.mxu0 %v33
    %47 = vmatpush.xpose.msra.mxu0 %v32
    %48 = vmatpush.xpose.msra.mxu0 %v31
    %49 = vmatpush.xpose.msra.mxu0 %v30
    %50 = vmatpush.xpose.msra.mxu0 %v29
    %51 = vmatpush.xpose.msra.mxu0 %v28
    %52 = vmatpush.xpose.msra.mxu0 %v27
    %53 = vmatpush.xpose.msra.mxu0 %v26
    %54 = vmatpush.xpose.msra.mxu0 %v25
    %55 = vmatpush.xpose.msra.mxu0 %v24
    %56 = vmatmul.f32.gmra.mxu0 %v22
    %v57 = vpop.f32.mrf.mxu0
    %v58 = vadd.f32 0.0, %v57
    %59 = vmatmul.f32.gmra.mxu0 %v23
    %v60 = vpop.f32.mrf.mxu0
    %v61 = vadd.f32 0.0, %v60
    %62 = vdwg.mxu0
    %v63 = vld [vmem:[%s3] sm:$0x1]
    %v65 = vperm.slane %v63, 0
    %v67 = vsub.f32 %v58, %v65
    %v68 = vsub.f32 %v61, %v65
    %69 = vmax.xlane.f32.xlu0 %v67
    %v70 = vpop.xlane.xlu0 %69
    %71 = vmax.xlane.f32.xlu0 %v68
    %v72 = vpop.xlane.xlu0 %71
    %v73 = vlaneseq
    %v74 = vand.u32 %v73, 127
    %vm75 = vcmp.eq.f32.partialorder %v67, %v70
    %vm76 = vcmp.eq.f32.partialorder %v68, %v72
    %v77 = vsel %vm75, %v74, 128
    %v78 = vsel %vm76, %v74, 128
    %v79 = vand.u32 %v77, 65535
    %v80 = vshra.s32 %v77, 16
    %v81 = vcvt.s32.f32 %v79
    %v82 = vcvt.s32.f32 %v80
    %83 = vmin.xlane.f32.xlu0 %v82
    %v84 = vpop.xlane.xlu0 %83
    %vm85 = vcmp.eq.f32.partialorder %v82, %v84
    %v86 = vsel %vm85, %v81, inf
    %87 = vmin.xlane.f32.xlu0 %v86
    %v88 = vpop.xlane.xlu0 %87
    %v89 = vcvt.f32.s32 %v88
    %v90 = vcvt.f32.s32 %v84
    %v91 = vshll.u32 %v90, 16
    %v92 = vadd.s32 %v91, %v89
    %v93 = vand.u32 %v78, 65535
    %v94 = vshra.s32 %v78, 16
    %v95 = vcvt.s32.f32 %v93
    %v96 = vcvt.s32.f32 %v94
    %97 = vmin.xlane.f32.xlu0 %v96
    %v98 = vpop.xlane.xlu0 %97
    %vm99 = vcmp.eq.f32.partialorder %v96, %v98
    %v100 = vsel %vm99, %v95, inf
    %101 = vmin.xlane.f32.xlu0 %v100
    %v102 = vpop.xlane.xlu0 %101
    %v103 = vcvt.f32.s32 %v102
    %v104 = vcvt.f32.s32 %v98
    %v105 = vshll.u32 %v104, 16
    %v106 = vadd.s32 %v105, %v103
    %v107 = vperm.slane %v92, %v74
    %v108 = vadd.s32 %v74, 4294967288
    %v109 = vperm.slane %v106, %v108
    %vm110 = vcmask 130112
    %v111 = vsel %vm110, %v109, %v107
    %vm112 = vcmask 122880
    %113 = vst.msk [vmem:[#allocation2] sm:$0x1] %vm112, %v111
    %s114 = smul.u32 0, 16
    %v115 = vlaneseq
    %v116 = vshrl.u32 %v115, 7
    %v117 = vadd.s32 %v116, 8
    %v118 = vstv %s114
    %v119 = vadd.s32 %v118, %v116
    %v120 = vadd.s32 %v118, %v117
    %vm121 = vcmp.lt.s32.totalorder %v119, 16
    %vm122 = vcmp.lt.s32.totalorder %v120, 16
    %v123 = vsel %vm121, 1, 0
    %v124 = vsel %vm122, 1, 0
    %v125 = vcvt.s32.f32 %v123
    %v126 = vcvt.s32.f32 %v124
    %vm127 = vcmp.eq.s32.totalorder %v74, %v92
    %vm128 = vcmp.eq.s32.totalorder %v74, %v106
    %v129 = vsel %vm127, 1, 0
    %v130 = vsel %vm128, 1, 0
    %v131 = vcvt.s32.f32 %v129
    %v132 = vcvt.s32.f32 %v130
    %v133 = vmul.f32 %v131, %v125
    %v134 = vmul.f32 %v132, %v126
    %v135 = vld [vmem:[%s2] sm:$0xff]
    %v136 = vld [vmem:[%s2 + $0x8] sm:$0xff]
    %v137 = vld [vmem:[%s2 + $0x10] sm:$0xff]
    %v138 = vld [vmem:[%s2 + $0x18] sm:$0xff]
    %v139 = vld [vmem:[%s2 + $0x20] sm:$0xff]
    %v140 = vld [vmem:[%s2 + $0x28] sm:$0xff]
    %v141 = vld [vmem:[%s2 + $0x30] sm:$0xff]
    %v142 = vld [vmem:[%s2 + $0x38] sm:$0xff]
    %v143 = vld [vmem:[%s2 + $0x40] sm:$0xff]
    %v144 = vld [vmem:[%s2 + $0x48] sm:$0xff]
    %v145 = vld [vmem:[%s2 + $0x50] sm:$0xff]
    %v146 = vld [vmem:[%s2 + $0x58] sm:$0xff]
    %v147 = vld [vmem:[%s2 + $0x60] sm:$0xff]
    %v148 = vld [vmem:[%s2 + $0x68] sm:$0xff]
    %v149 = vld [vmem:[%s2 + $0x70] sm:$0xff]
    %v150 = vld [vmem:[%s2 + $0x78] sm:$0xff]
    %151 = vmatpush.msra.mxu0 %v150
    %152 = vmatpush.msra.mxu0 %v149
    %153 = vmatpush.msra.mxu0 %v148
    %154 = vmatpush.msra.mxu0 %v147
    %155 = vmatpush.msra.mxu0 %v146
    %156 = vmatpush.msra.mxu0 %v145
    %157 = vmatpush.msra.mxu0 %v144
    %158 = vmatpush.msra.mxu0 %v143
    %159 = vmatpush.msra.mxu0 %v142
    %160 = vmatpush.msra.mxu0 %v141
    %161 = vmatpush.msra.mxu0 %v140
    %162 = vmatpush.msra.mxu0 %v139
    %163 = vmatpush.msra.mxu0 %v138
    %164 = vmatpush.msra.mxu0 %v137
    %165 = vmatpush.msra.mxu0 %v136
    %166 = vmatpush.msra.mxu0 %v135
    %167 = vmatmul.f32.gmra.mxu0 %v133
    %v168 = vpop.f32.mrf.mxu0
    %v169 = vadd.f32 0.0, %v168
    %170 = vmatmul.f32.gmra.mxu0 %v134
    %v171 = vpop.f32.mrf.mxu0
    %v172 = vadd.f32 0.0, %v171
    %173 = vdwg.mxu0
    %174 = vst [vmem:[%s4] sm:$0xff] %v169
    %175 = vst [vmem:[%s4 + $0x8] sm:$0xff] %v172
    %vm176 = vcmask 130048
    %v178 = vsel %vm176, 1.0, 0
    %180 = vmatpush.msra.mxu0 0.0
    %181 = vmatpush.msra.mxu0 0.0
    %182 = vmatpush.msra.mxu0 0.0
    %183 = vmatpush.msra.mxu0 0.0
    %184 = vmatpush.msra.mxu0 0.0
    %185 = vmatpush.msra.mxu0 0.0
    %186 = vmatpush.msra.mxu0 0.0
    %187 = vmatpush.msra.mxu0 0.0
    %188 = vmatpush.msra.mxu0 0.0
    %189 = vmatpush.msra.mxu0 0.0
    %190 = vmatpush.msra.mxu0 0.0
    %191 = vmatpush.msra.mxu0 0.0
    %192 = vmatpush.msra.mxu0 0.0
    %193 = vmatpush.msra.mxu0 0.0
    %194 = vmatpush.msra.mxu0 %v134
    %195 = vmatpush.msra.mxu0 %v133
    %196 = vmatmul.f32.gmra.mxu0 %v178
    %v197 = vpop.f32.mrf.mxu0
    %v198 = vadd.f32 0.0, %v197
    %199 = vdwg.mxu0
    %200 = vst [vmem:[%s6] sm:$0x1] %v198
    %v201 = vsub.f32 %v22, %v169
    %v202 = vsub.f32 %v23, %v172
    %v203 = vmul.f32 %v201, %v201
    %v204 = vmul.f32 %v202, %v202
    %205 = vmatpush.msra.mxu0 0.0
    %206 = vmatpush.msra.mxu0 0.0
    %207 = vmatpush.msra.mxu0 0.0
    %208 = vmatpush.msra.mxu0 0.0
    %209 = vmatpush.msra.mxu0 0.0
    %210 = vmatpush.msra.mxu0 0.0
    %211 = vmatpush.msra.mxu0 0.0
    %212 = vmatpush.msra.mxu0 0.0
    %213 = vmatpush.msra.mxu0 0.0
    %214 = vmatpush.msra.mxu0 0.0
    %215 = vmatpush.msra.mxu0 0.0
    %216 = vmatpush.msra.mxu0 0.0
    %217 = vmatpush.msra.mxu0 0.0
    %218 = vmatpush.msra.mxu0 0.0
    %219 = vmatpush.msra.mxu0 %v204
    %220 = vmatpush.msra.mxu0 %v203
    %221 = vmatmul.f32.gmra.mxu0 %v178
    %v222 = vpop.f32.mrf.mxu0
    %v223 = vadd.f32 0.0, %v222
    %224 = vdwg.mxu0
    %225 = vst [vmem:[%s7] sm:$0x1] %v223
    // Predicated region
    $region18: #{vq_embedding_forward.1} parent=1 // pred_check
      _
    $region19: #{vq_embedding_forward.1} parent=1 // pred_check_branch
      %227 = sbr.rel (0) target = $region21
    $region20: #{vq_embedding_forward.1} parent=1 // pred_region
      _
    $region21: #{vq_embedding_forward.1} parent=1 // pred_fallthru
      _
    // Predicated region
    $region22: #{vq_embedding_forward.1} parent=1 // pred_check
      _
    $region23: #{vq_embedding_forward.1} parent=1 // pred_check_branch
      %229 = sbr.rel (0) target = $region25
    $region24: #{vq_embedding_forward.1} parent=1 // pred_region
      %231 = vsyncadd [#allocation3], 0
      %s233 = sshll.u32 [#allocation2], 4
      %s234 = int_to_ptr.vmem [resolvable:$true] %s233
      %s235 = sshll.u32 %s5, 4
      %s236 = int_to_ptr.hbm [resolvable:$true] %s235
      %238 = dma.vmem_to_hbm [thread:$0]  %s234, 16, %s236, [#allocation3]
    $region25: #{vq_embedding_forward.1} parent=1 // pred_fallthru
      _
    // Predicated region
    $region26: #{vq_embedding_forward.1} parent=1 // pred_check
      _
    $region27: #{vq_embedding_forward.1} parent=1 // pred_check_branch
      %240 = sbr.rel (0) target = $region29
    $region28: #{vq_embedding_forward.1} parent=1 // pred_region
      _
    $region29: #{vq_embedding_forward.1} parent=1 // pred_fallthru
      _
    // Predicated region
    $region30: #{vq_embedding_forward.1} parent=1 // pred_check
      _
    $region31: #{vq_embedding_forward.1} parent=1 // pred_check_branch
      %242 = sbr.rel (0) target = $region33
    $region32: #{vq_embedding_forward.1} parent=1 // pred_region
      _
    $region33: #{vq_embedding_forward.1} parent=1 // pred_fallthru
      _
    // Predicated region
    $region34: #{vq_embedding_forward.1} parent=1 // pred_check
      _
    $region35: #{vq_embedding_forward.1} parent=1 // pred_check_branch
      %244 = sbr.rel (0) target = $region37
    $region36: #{vq_embedding_forward.1} parent=1 // pred_region
      _
    $region37: #{vq_embedding_forward.1} parent=1 // pred_fallthru
      _
    // Predicated region
    $region38: #{vq_embedding_forward.1} parent=1 // pred_check
      _
    $region39: #{vq_embedding_forward.1} parent=1 // pred_check_branch
      %246 = sbr.rel (0) target = $region41
    $region40: #{vq_embedding_forward.1} parent=1 // pred_region
      %248 = dma.done [#allocation3], 16
    $region41: #{vq_embedding_forward.1} parent=1 // pred_fallthru
      _
    // Predicated region
    $region42: #{vq_embedding_forward.1} parent=1 // pred_check
      _
    $region43: #{vq_embedding_forward.1} parent=1 // pred_check_branch
      %250 = sbr.rel (0) target = $region45
    $region44: #{vq_embedding_forward.1} parent=1 // pred_region
      _
    $region45: #{vq_embedding_forward.1} parent=1 // pred_fallthru
      _
    // Predicated region
    $region46: #{vq_embedding_forward.1} parent=1 // pred_check
      _
    $region47: #{vq_embedding_forward.1} parent=1 // pred_check_branch
      %252 = sbr.rel (0) target = $region49
    $region48: #{vq_embedding_forward.1} parent=1 // pred_region
      _
    $region49: #{vq_embedding_forward.1} parent=1 // pred_fallthru
      _
    %253 = vsyncpa [#allocation3], 1

</llo_original>
